<compile_context>
chip_gen: v7x
topology: tpu7x:2x2x1
jax: 0.10.0
libtpu: 0.0.40
codegen_flags: <defaults>
</compile_context>

<pallas_src>
import math

import jax
import jax.numpy as jnp
from jax.experimental import pallas as pl
from jax.experimental.pallas import tpu as pltpu


def _elu(x):
    # ELU with alpha=1 (PyTorch default).
    # TODO(synk): switch to jnp.expm1 for bit-exact parity with PyTorch's
    # expm1-based ELU once an expm1 lowering is guaranteed; exp(x)-1 differs
    # by <~1e-7 absolute only for x -> 0-.
    # TODO(synk): if EUP becomes the binding slot on v6e/v7x, compute the exp
    # on bf16 operands (bf16 EUP) while keeping compare/select in f32.
    return jnp.where(x > 0, x, jnp.exp(x) - 1.0)


def _make_kernel(snippets, compute_dtype):
    inv_s = 1.0 / float(snippets)

    def kernel(x_ref, gsum_ref, w1_ref, b1_ref, w2_ref, b2_ref, w3_ref,
               b3_ref, out_ref):
        x = x_ref[...]                                   # (rows, dim), stream dtype
        if x.dtype != compute_dtype:
            # Cast for the MXU *inside* the kernel: no extra HBM traffic.
            x = x.astype(compute_dtype)

        # Linear(dim, 128) -> ELU  (f32 accumulation / activation math)
        h1 = jnp.dot(x, w1_ref[...], preferred_element_type=jnp.float32)
        h1 = _elu(h1 + b1_ref[...])                      # (rows, 128) f32

        # Linear(128, 32) -> ELU
        if compute_dtype != jnp.float32:
            h1 = h1.astype(compute_dtype)                # bf16 MXU path
        h2 = jnp.dot(h1, w2_ref[...], preferred_element_type=jnp.float32)
        h2 = _elu(h2 + b2_ref[...])                      # (rows, 32) f32

        # Linear(32, 1) first (w3-first: rows x 1, cheap), then the per-batch
        # mean over snippets via the VMEM-resident block-diagonal group-sum
        # selector (constant index_map input; no per-step mask construction).
        s_rows = jnp.dot(h2, w3_ref[...],
                         preferred_element_type=jnp.float32)      # (rows, 1)
        s = jnp.dot(gsum_ref[...], s_rows,
                    preferred_element_type=jnp.float32)           # (tb, 1)
        out_ref[0] = s * inv_s + b3_ref[0, 0]            # (tb, 1)

    return kernel


def _pick_batch_tile(batch, snippets, dim, x_itemsize, *,
                     block_bytes=4 << 20, gsum_bytes=4 << 20,
                     rows_max=4096, min_grid_steps=8):
    """Whole batch elements per grid step (rows per step = tb * snippets)."""
    # rows = tb*snippets must be a multiple of 8 (x-block sublane constraint).
    step = 8 // math.gcd(snippets, 8)
    lane_dim = -(-dim // 128) * 128                      # VMEM lane padding
    # Cap rows by: x-block byte budget (double-buffered by the pipeline), the
    # group-sum selector budget (tb*rows*4 = 4*rows^2/snippets bytes), and an
    # absolute cap so tiles stay well inside v7x's 64 MiB VMEM.
    rows_cap = min(block_bytes // (lane_dim * x_itemsize),
                   int(math.sqrt(gsum_bytes / 4.0 * snippets)),
                   rows_max)
    rows_cap = max(rows_cap, snippets * step)
    tb = max(step, (rows_cap // snippets) // step * step)
    # Keep several grid steps in flight when the batch allows it, so the
    # software pipeline (and the v7x two-TensorCore split) has work to overlap.
    if batch >= step * min_grid_steps:
        tb = min(tb, max(step, (batch // min_grid_steps) // step * step))
    # Never exceed the (padded) batch.
    tb = min(tb, -(-batch // step) * step)
    return tb


def vqa_model_regression_forward(x, params, *, compute_dtype=None,
                                 block_bytes=4 << 20, rows_max=4096,
                                 min_grid_steps=8):
    """x: (batch, snippets, dim) -> (batch,) float32 scores."""
    batch, snippets, dim = x.shape
    w1, b1, w2, b2, w3, b3 = params
    h1d = w1.shape[1]     # 128
    h2d = w2.shape[1]     # 32

    # MXU operand dtype defaults to the incoming stream dtype (no wrapper cast
    # of the big row stream -> no extra HBM pass).
    if compute_dtype is None:
        compute_dtype = x.dtype
    compute_dtype = jnp.dtype(compute_dtype)

    tb = _pick_batch_tile(batch, snippets, dim, x.dtype.itemsize,
                          block_bytes=block_bytes, rows_max=rows_max,
                          min_grid_steps=min_grid_steps)
    batch_p = -(-batch // tb) * tb
    rows = tb * snippets
    grid_steps = batch_p // tb

    if batch_p != batch:
        # One-time zero pad so every grid step covers whole batch elements
        # (padded groups produce finite, discarded outputs).
        x = jnp.pad(x, ((0, batch_p - batch), (0, 0), (0, 0)))
    x2d = x.reshape(batch_p * snippets, dim)             # NOTE: no dtype cast

    # Block-diagonal group-sum selector (tb, rows): 1.0 where row r belongs to
    # batch element t of the tile.  Built once; constant index_map keeps it
    # VMEM-resident across grid steps on every TensorCore.
    t_ids = jnp.arange(tb, dtype=jnp.int32)[:, None]
    r_ids = jnp.arange(rows, dtype=jnp.int32)[None, :]
    gsum = ((r_ids // snippets) == t_ids).astype(jnp.float32)

    # Weights for the two big matmuls in the MXU dtype (tiny one-time cast);
    # biases / final layer / accumulation stay f32.
    w1c = w1.astype(compute_dtype)
    w2c = w2.astype(compute_dtype)
    b1f = b1.astype(jnp.float32)
    b2f = b2.astype(jnp.float32)
    w3f = w3.astype(jnp.float32)
    b3f = b3.astype(jnp.float32)

    kernel = _make_kernel(snippets, compute_dtype)

    out = pl.pallas_call(
        kernel,
        out_shape=jax.ShapeDtypeStruct((grid_steps, tb, 1), jnp.float32),
        grid=(grid_steps,),
        in_specs=[
            # x rows: one block of `tb` whole batch elements per grid step
            pl.BlockSpec((rows, dim), lambda i: (i, 0)),
            # group-sum selector + weights/biases: constant index_map -> resident
            pl.BlockSpec((tb, rows), lambda i: (0, 0)),
            pl.BlockSpec((dim, h1d), lambda i: (0, 0)),
            pl.BlockSpec((1, h1d), lambda i: (0, 0)),
            pl.BlockSpec((h1d, h2d), lambda i: (0, 0)),
            pl.BlockSpec((1, h2d), lambda i: (0, 0)),
            pl.BlockSpec((h2d, 1), lambda i: (0, 0)),
            # final bias as an SMEM scalar
            pl.BlockSpec(memory_space=pltpu.MemorySpace.SMEM),
        ],
        out_specs=pl.BlockSpec((1, tb, 1), lambda i: (i, 0, 0)),
        compiler_params=pltpu.CompilerParams(
            dimension_semantics=("parallel",),
            vmem_limit_bytes=32 << 20),
    )(x2d, gsum, w1c, b1f, w2c, b2f, w3f, b3f)

    return out.reshape(batch_p)[:batch]


def init_params(key, dim, hidden=32):
    """Deterministic xavier_normal_ weights, zero biases (matches _initialize_weights)."""
    def xavier_normal(k, fan_in, fan_out):
        std = (2.0 / (fan_in + fan_out)) ** 0.5
        # stored as (in, out) == transposed PyTorch layout
        return (std * jax.random.normal(k, (fan_in, fan_out))).astype(jnp.float32)

    k1, k2, k3 = jax.random.split(key, 3)
    w1 = xavier_normal(k1, dim, hidden * 4)          # Linear(dim, 128)
    b1 = jnp.zeros((1, hidden * 4), jnp.float32)
    w2 = xavier_normal(k2, hidden * 4, hidden)       # Linear(128, 32)
    b2 = jnp.zeros((1, hidden), jnp.float32)
    w3 = xavier_normal(k3, hidden, 1)                # Linear(32, 1)
    b3 = jnp.zeros((1, 1), jnp.float32)
    return (w1, b1, w2, b2, w3, b3)


def reference_forward(x, params):
    """Pure-JAX reference of the PyTorch forward."""
    batch, snippets, dim = x.shape
    w1, b1, w2, b2, w3, b3 = params
    h = x.astype(jnp.float32).reshape(batch * snippets, dim)
    h = _elu(h @ w1 + b1)
    h = _elu(h @ w2 + b2)
    s = h @ w3 + b3
    return jnp.mean(s.reshape(batch, snippets), axis=1)


if __name__ == "__main__":
    key = jax.random.PRNGKey(0)
    ks = jax.random.split(key, 6)

    # --- config 1: small (args.fave & args.f1 -> dim = 64), single grid step
    b1_, s1_, d1_ = 2, 8, 64
    x1 = jax.random.normal(ks[0], (b1_, s1_, d1_), dtype=jnp.float32)
    p1 = init_params(ks[1], d1_)
    out1 = jax.block_until_ready(vqa_model_regression_forward(x1, p1))
    ref1 = jax.block_until_ready(reference_forward(x1, p1))
    assert out1.shape == (b1_,)
    assert jnp.allclose(out1, ref1, atol=1e-4, rtol=1e-4), (out1, ref1)

    # --- config 2: multi-step "parallel" grid with batch tiling (dim = 64*3)
    b2_, s2_, d2_ = 16, 16, 192
    x2 = jax.random.normal(ks[2], (b2_, s2_, d2_), dtype=jnp.float32)
    p2 = init_params(ks[3], d2_)
    out2 = jax.block_until_ready(vqa_model_regression_forward(x2, p2))
    ref2 = jax.block_until_ready(reference_forward(x2, p2))
    assert out2.shape == (b2_,)
    assert jnp.allclose(out2, ref2, atol=1e-4, rtol=1e-4), (
        float(jnp.max(jnp.abs(out2 - ref2))))

    # --- config 3: odd snippets / batch -> zero-pad path (no whole-batch fallback)
    b3_, s3_, d3_ = 6, 5, 64
    x3 = jax.random.normal(ks[4], (b3_, s3_, d3_), dtype=jnp.float32)
    p3 = init_params(ks[5], d3_)
    out3 = jax.block_until_ready(vqa_model_regression_forward(x3, p3))
    ref3 = jax.block_until_ready(reference_forward(x3, p3))
    assert out3.shape == (b3_,)
    assert jnp.allclose(out3, ref3, atol=1e-4, rtol=1e-4), (
        float(jnp.max(jnp.abs(out3 - ref3))))

    # --- bf16 row stream from the producer: kernel reads bf16 directly (half
    # the HBM bytes, bf16 MXU operands); biases/ELU/accumulation stay f32.
    xb = x2.astype(jnp.bfloat16)
    outb = jax.block_until_ready(vqa_model_regression_forward(xb, p2))
    assert outb.shape == (b2_,)
    assert jnp.allclose(outb, ref2, atol=5e-2, rtol=5e-2), (
        float(jnp.max(jnp.abs(outb - ref2))))

    print("KERNEL_OK")
</pallas_src>

<mosaic_0001>
module attributes {stable_mosaic.version = 11 : i64} {
  func.func @kernel(%arg0: i32, %arg1: memref<16x64xf32, #tpu.memory_space<vmem>>, %arg2: memref<2x16xf32, #tpu.memory_space<vmem>>, %arg3: memref<64x128xf32, #tpu.memory_space<vmem>>, %arg4: memref<1x128xf32, #tpu.memory_space<vmem>>, %arg5: memref<128x32xf32, #tpu.memory_space<vmem>>, %arg6: memref<1x32xf32, #tpu.memory_space<vmem>>, %arg7: memref<32x1xf32, #tpu.memory_space<vmem>>, %arg8: memref<1x1xf32, #tpu.memory_space<smem>>, %arg9: memref<1x2x1xf32, #tpu.memory_space<vmem>>) attributes {dimension_semantics = [#tpu.dimension_semantics<parallel>], iteration_bounds = array<i64: 1>, scalar_prefetch = 0 : i64, scratch_operands = 0 : i64, tpu.core_type = #tpu.core_type<tc>, window_params = [{transform_indices = @transform_0, window_bounds = array<i64: 16, 64>}, {pipeline_mode = #tpu.pipeline_mode<synchronous>, transform_indices = @transform_1, window_bounds = array<i64: 2, 16>}, {pipeline_mode = #tpu.pipeline_mode<synchronous>, transform_indices = @transform_2, window_bounds = array<i64: 64, 128>}, {pipeline_mode = #tpu.pipeline_mode<synchronous>, transform_indices = @transform_3, window_bounds = array<i64: 1, 128>}, {pipeline_mode = #tpu.pipeline_mode<synchronous>, transform_indices = @transform_4, window_bounds = array<i64: 128, 32>}, {pipeline_mode = #tpu.pipeline_mode<synchronous>, transform_indices = @transform_5, window_bounds = array<i64: 1, 32>}, {pipeline_mode = #tpu.pipeline_mode<synchronous>, transform_indices = @transform_6, window_bounds = array<i64: 32, 1>}, {transform_indices = @transform_7, window_bounds = array<i64: 1, 1>}, {transform_indices = @transform_8, window_bounds = array<i64: 1, 2, 1>}]} {
    %c0 = arith.constant 0 : index
    %c0_0 = arith.constant 0 : index
    %0 = vector.load %arg1[%c0, %c0_0] : memref<16x64xf32, #tpu.memory_space<vmem>>, vector<16x64xf32>
    %c0_1 = arith.constant 0 : index
    %c0_2 = arith.constant 0 : index
    %1 = vector.load %arg3[%c0_1, %c0_2] : memref<64x128xf32, #tpu.memory_space<vmem>>, vector<64x128xf32>
    %cst = arith.constant dense<0.000000e+00> : vector<16x128xf32>
    %2 = tpu.matmul %0, %1, %cst {dimension_numbers = #tpu.dot_dimension_numbers<[1], [0], [0], [1], [0, 0, 1, 1], [], []>} : vector<16x64xf32>, vector<64x128xf32>, vector<16x128xf32> -> vector<16x128xf32>
    %c0_3 = arith.constant 0 : index
    %c0_4 = arith.constant 0 : index
    %3 = vector.load %arg4[%c0_3, %c0_4] : memref<1x128xf32, #tpu.memory_space<vmem>>, vector<1x128xf32>
    %4 = vector.broadcast %3 : vector<1x128xf32> to vector<16x128xf32>
    %5 = arith.addf %2, %4 : vector<16x128xf32>
    %cst_5 = arith.constant 0.000000e+00 : f32
    %6 = vector.broadcast %cst_5 : f32 to vector<16x128xf32>
    %7 = arith.cmpf ogt, %5, %6 : vector<16x128xf32>
    %8 = math.exp %5 : vector<16x128xf32>
    %cst_6 = arith.constant 1.000000e+00 : f32
    %9 = vector.broadcast %cst_6 : f32 to vector<16x128xf32>
    %10 = arith.subf %8, %9 : vector<16x128xf32>
    %11 = arith.select %7, %5, %10 : vector<16x128xi1>, vector<16x128xf32>
    %c0_7 = arith.constant 0 : index
    %c0_8 = arith.constant 0 : index
    %12 = vector.load %arg5[%c0_7, %c0_8] : memref<128x32xf32, #tpu.memory_space<vmem>>, vector<128x32xf32>
    %cst_9 = arith.constant dense<0.000000e+00> : vector<16x32xf32>
    %13 = tpu.matmul %11, %12, %cst_9 {dimension_numbers = #tpu.dot_dimension_numbers<[1], [0], [0], [1], [0, 0, 1, 1], [], []>} : vector<16x128xf32>, vector<128x32xf32>, vector<16x32xf32> -> vector<16x32xf32>
    %c0_10 = arith.constant 0 : index
    %c0_11 = arith.constant 0 : index
    %14 = vector.load %arg6[%c0_10, %c0_11] : memref<1x32xf32, #tpu.memory_space<vmem>>, vector<1x32xf32>
    %15 = vector.broadcast %14 : vector<1x32xf32> to vector<16x32xf32>
    %16 = arith.addf %13, %15 : vector<16x32xf32>
    %cst_12 = arith.constant 0.000000e+00 : f32
    %17 = vector.broadcast %cst_12 : f32 to vector<16x32xf32>
    %18 = arith.cmpf ogt, %16, %17 : vector<16x32xf32>
    %19 = math.exp %16 : vector<16x32xf32>
    %cst_13 = arith.constant 1.000000e+00 : f32
    %20 = vector.broadcast %cst_13 : f32 to vector<16x32xf32>
    %21 = arith.subf %19, %20 : vector<16x32xf32>
    %22 = arith.select %18, %16, %21 : vector<16x32xi1>, vector<16x32xf32>
    %c0_14 = arith.constant 0 : index
    %c0_15 = arith.constant 0 : index
    %23 = vector.load %arg7[%c0_14, %c0_15] : memref<32x1xf32, #tpu.memory_space<vmem>>, vector<32x1xf32>
    %cst_16 = arith.constant dense<0.000000e+00> : vector<16x1xf32>
    %24 = tpu.matmul %22, %23, %cst_16 {dimension_numbers = #tpu.dot_dimension_numbers<[1], [0], [0], [1], [0, 0, 1, 1], [], []>} : vector<16x32xf32>, vector<32x1xf32>, vector<16x1xf32> -> vector<16x1xf32>
    %c0_17 = arith.constant 0 : index
    %c0_18 = arith.constant 0 : index
    %25 = vector.load %arg2[%c0_17, %c0_18] : memref<2x16xf32, #tpu.memory_space<vmem>>, vector<2x16xf32>
    %cst_19 = arith.constant dense<0.000000e+00> : vector<2x1xf32>
    %26 = tpu.matmul %25, %24, %cst_19 {dimension_numbers = #tpu.dot_dimension_numbers<[1], [0], [0], [1], [0, 0, 1, 1], [], []>} : vector<2x16xf32>, vector<16x1xf32>, vector<2x1xf32> -> vector<2x1xf32>
    %cst_20 = arith.constant 1.250000e-01 : f32
    %27 = vector.broadcast %cst_20 : f32 to vector<2x1xf32>
    %28 = arith.mulf %26, %27 : vector<2x1xf32>
    %c0_21 = arith.constant 0 : index
    %c0_22 = arith.constant 0 : index
    %29 = memref.load %arg8[%c0_21, %c0_22] : memref<1x1xf32, #tpu.memory_space<smem>>
    %30 = vector.broadcast %29 : f32 to vector<2x1xf32>
    %31 = arith.addf %28, %30 : vector<2x1xf32>
    %c0_23 = arith.constant 0 : index
    %c0_24 = arith.constant 0 : index
    %c0_25 = arith.constant 0 : index
    %32 = vector.load %arg9[%c0_23, %c0_24, %c0_25] : memref<1x2x1xf32, #tpu.memory_space<vmem>>, vector<1x2x1xf32>
    %33 = vector.shape_cast %32 : vector<1x2x1xf32> to vector<2x1xf32>
    %34 = vector.shape_cast %31 : vector<2x1xf32> to vector<1x2x1xf32>
    tpu.vector_store %arg9[%c0_23, %c0_24, %c0_25], %34 {strides = array<i32>} : memref<1x2x1xf32, #tpu.memory_space<vmem>>, vector<1x2x1xf32>,
    return
  }
  func.func @transform_0(%arg0: i32) -> (i32, i32) {
    %c0_i32 = arith.constant 0 : i32
    %c0_i32_0 = arith.constant 0 : i32
    return %arg0, %c0_i32 : i32, i32
  }
  func.func @transform_1(%arg0: i32) -> (i32, i32) {
    %c0_i32 = arith.constant 0 : i32
    %c0_i32_0 = arith.constant 0 : i32
    %c0_i32_1 = arith.constant 0 : i32
    return %c0_i32, %c0_i32_0 : i32, i32
  }
  func.func @transform_2(%arg0: i32) -> (i32, i32) {
    %c0_i32 = arith.constant 0 : i32
    %c0_i32_0 = arith.constant 0 : i32
    %c0_i32_1 = arith.constant 0 : i32
    return %c0_i32, %c0_i32_0 : i32, i32
  }
  func.func @transform_3(%arg0: i32) -> (i32, i32) {
    %c0_i32 = arith.constant 0 : i32
    %c0_i32_0 = arith.constant 0 : i32
    %c0_i32_1 = arith.constant 0 : i32
    return %c0_i32, %c0_i32_0 : i32, i32
  }
  func.func @transform_4(%arg0: i32) -> (i32, i32) {
    %c0_i32 = arith.constant 0 : i32
    %c0_i32_0 = arith.constant 0 : i32
    %c0_i32_1 = arith.constant 0 : i32
    return %c0_i32, %c0_i32_0 : i32, i32
  }
  func.func @transform_5(%arg0: i32) -> (i32, i32) {
    %c0_i32 = arith.constant 0 : i32
    %c0_i32_0 = arith.constant 0 : i32
    %c0_i32_1 = arith.constant 0 : i32
    return %c0_i32, %c0_i32_0 : i32, i32
  }
  func.func @transform_6(%arg0: i32) -> (i32, i32) {
    %c0_i32 = arith.constant 0 : i32
    %c0_i32_0 = arith.constant 0 : i32
    %c0_i32_1 = arith.constant 0 : i32
    return %c0_i32, %c0_i32_0 : i32, i32
  }
  func.func @transform_7(%arg0: i32) -> (i32, i32) {
    %c0_i32 = arith.constant 0 : i32
    %c0_i32_0 = arith.constant 0 : i32
    %c0_i32_1 = arith.constant 0 : i32
    return %c0_i32, %c0_i32_0 : i32, i32
  }
  func.func @transform_8(%arg0: i32) -> (i32, i32, i32) {
    %c0_i32 = arith.constant 0 : i32
    %c0_i32_0 = arith.constant 0 : i32
    %c0_i32_1 = arith.constant 0 : i32
    return %arg0, %c0_i32, %c0_i32_0 : i32, i32, i32
  }
}

</mosaic_0001>

<llo_original>
// kernel: tpu_custom_call.1
$region0: #{tpu_custom_call.1}
  #allocation0 [shape = 'u32[]', space=smem, size = 0x4, offset = 0x4, fixed_abs, tag = 'smem constant byte address 0x4 - core index']
  #allocation1 [shape = 'u32[144,128]{1,0:T(1,128)}', space=vmem, size = 0x12000, scoped, tag = 'internal scratch']
  #allocation2 [shape = 'f32[1,1]{1,0:T(1,128)S(6)}', space=smem, size = 0x200, scoped, tag = 'scoped memory for tpu_custom_call.1']
  %s0 = inlined_call_operand.vmem [shape: f32[16,64], index: 0, kind: input, shape index: {}]
  %s1 = inlined_call_operand.vmem [shape: f32[2,16], index: 1, kind: input, shape index: {}]
  %s2 = inlined_call_operand.vmem [shape: f32[64,128], index: 2, kind: input, shape index: {}]
  %s3 = inlined_call_operand.vmem [shape: f32[1,128], index: 3, kind: input, shape index: {}]
  %s4 = inlined_call_operand.vmem [shape: f32[128,32], index: 4, kind: input, shape index: {}]
  %s5 = inlined_call_operand.vmem [shape: f32[1,32], index: 5, kind: input, shape index: {}]
  %s6 = inlined_call_operand.vmem [shape: f32[32,1], index: 6, kind: input, shape index: {}]
  %s7 = inlined_call_operand.<no memory space> [shape: f32[1,1], index: 7, kind: input, shape index: {}]
  %s8 = inlined_call_operand.vmem [shape: f32[1,2,1], index: 8, kind: output, shape index: {}]
  %s9 = sld [smem:[#allocation0]]
  $region42: #{tpu_custom_call.1} parent=0
    _
  %s11 = ssub.s32 1, %s9
  %s12 = scalar_select 0, %s11, %s9
  %13 = sst [smem:[#allocation2]] %s7
  // Predicated region
  $region2: #{tpu_custom_call.1} parent=0 // pred_check
    _
  $region3: #{tpu_custom_call.1} parent=0 // pred_check_branch
    %15 = sbr.rel (0) target = $region5
  $region4: #{tpu_custom_call.1} parent=0 // pred_region
    _
  $region5: #{tpu_custom_call.1} parent=0 // pred_fallthru
    _
  // Predicated region
  $region6: #{tpu_custom_call.1} parent=0 // pred_check
    _
  $region7: #{tpu_custom_call.1} parent=0 // pred_check_branch
    %17 = sbr.rel (0) target = $region9
  $region8: #{tpu_custom_call.1} parent=0 // pred_region
    _
  $region9: #{tpu_custom_call.1} parent=0 // pred_fallthru
    _
  // Predicated region
  $region10: #{tpu_custom_call.1} parent=0 // pred_check
    _
  $region11: #{tpu_custom_call.1} parent=0 // pred_check_branch
    %19 = sbr.rel (0) target = $region13
  $region12: #{tpu_custom_call.1} parent=0 // pred_region
    _
  $region13: #{tpu_custom_call.1} parent=0 // pred_fallthru
    _
  // Predicated region
  $region14: #{tpu_custom_call.1} parent=0 // pred_check
    _
  $region15: #{tpu_custom_call.1} parent=0 // pred_check_branch
    %21 = sbr.rel (0) target = $region17
  $region16: #{tpu_custom_call.1} parent=0 // pred_region
    _
  $region17: #{tpu_custom_call.1} parent=0 // pred_fallthru
    _
  // Predicated region
  $region18: #{tpu_custom_call.1} parent=0 // pred_check
    _
  $region19: #{tpu_custom_call.1} parent=0 // pred_check_branch
    %23 = sbr.rel (0) target = $region21
  $region20: #{tpu_custom_call.1} parent=0 // pred_region
    _
  $region21: #{tpu_custom_call.1} parent=0 // pred_fallthru
    _
  // Predicated region
  $region22: #{tpu_custom_call.1} parent=0 // pred_check
    _
  $region23: #{tpu_custom_call.1} parent=0 // pred_check_branch
    %25 = sbr.rel (0) target = $region25
  $region24: #{tpu_custom_call.1} parent=0 // pred_region
    _
  $region25: #{tpu_custom_call.1} parent=0 // pred_fallthru
    _
  // Predicated region
  $region26: #{tpu_custom_call.1} parent=0 // pred_check
    _
  $region27: #{tpu_custom_call.1} parent=0 // pred_check_branch
    %27 = sbr.rel (0) target = $region29
  $region28: #{tpu_custom_call.1} parent=0 // pred_region
    _
  $region29: #{tpu_custom_call.1} parent=0 // pred_fallthru
    _
  // Predicated region
  $region30: #{tpu_custom_call.1} parent=0 // pred_check
    _
  $region31: #{tpu_custom_call.1} parent=0 // pred_check_branch
    %29 = sbr.rel (0) target = $region33
  $region32: #{tpu_custom_call.1} parent=0 // pred_region
    _
  $region33: #{tpu_custom_call.1} parent=0 // pred_fallthru
    _
  %v30 = vld [vmem:[%s0] sm:$0xff]
  %v31 = vld [vmem:[%s0 + $0x8] sm:$0xff]
  %v32 = vld [vmem:[%s2] sm:$0xff]
  %v33 = vld [vmem:[%s2 + $0x8] sm:$0xff]
  %v34 = vld [vmem:[%s2 + $0x10] sm:$0xff]
  %v35 = vld [vmem:[%s2 + $0x18] sm:$0xff]
  %v36 = vld [vmem:[%s2 + $0x20] sm:$0xff]
  %v37 = vld [vmem:[%s2 + $0x28] sm:$0xff]
  %v38 = vld [vmem:[%s2 + $0x30] sm:$0xff]
  %v39 = vld [vmem:[%s2 + $0x38] sm:$0xff]
  %v40 = vld [vmem:[%s3] sm:$0x1]
  %v42 = vlaneseq
  %v43 = vshrl.u32 %v42, 7
  %v44 = vsub.s32 0, %v43
  %v45 = vrot.slane %v40, %v44
  %vm47 = vcmask 523264
  %v49 = vsel %vm47, %v30, 0
  %v52 = vsel %vm47, %v31, 0
  %54 = vmatprep.subr.mxu0 0.0
  %55 = vmatpush1.msra.mxu0 %v32
  %56 = vmatprep.subr.mxu0 0.0
  %57 = vmatpush1.msra.mxu0 %v33
  %58 = vmatprep.subr.mxu0 0.0
  %59 = vmatpush1.msra.mxu0 %v34
  %60 = vmatprep.subr.mxu0 0.0
  %61 = vmatpush1.msra.mxu0 %v35
  %62 = vmatprep.subr.mxu0 0.0
  %63 = vmatpush1.msra.mxu0 %v36
  %64 = vmatprep.subr.mxu0 0.0
  %65 = vmatpush1.msra.mxu0 %v37
  %66 = vmatprep.subr.mxu0 0.0
  %67 = vmatpush1.msra.mxu0 %v38
  %68 = vmatprep.subr.mxu0 0.0
  %69 = vmatpush1.msra.mxu0 %v39
  %70 = vmatprep.subr.mxu0 0.0
  %71 = vmatpush1.msra.mxu0 0.0
  %72 = vmatprep.subr.mxu0 0.0
  %73 = vmatpush1.msra.mxu0 0.0
  %74 = vmatprep.subr.mxu0 0.0
  %75 = vmatpush1.msra.mxu0 0.0
  %76 = vmatprep.subr.mxu0 0.0
  %77 = vmatpush1.msra.mxu0 0.0
  %78 = vmatprep.subr.mxu0 0.0
  %79 = vmatpush1.msra.mxu0 0.0
  %80 = vmatprep.subr.mxu0 0.0
  %81 = vmatpush1.msra.mxu0 0.0
  %82 = vmatprep.subr.mxu0 0.0
  %83 = vmatpush1.msra.mxu0 0.0
  %84 = vmatprep.subr.mxu0 0.0
  %85 = vmatpush1.msra.mxu0 0.0
  %86 = vmatprep.subr.mxu0 0.0
  %87 = vmatpush1.msra.mxu0 0.0
  %88 = vmatprep.subr.mxu0 0.0
  %89 = vmatpush1.msra.mxu0 0.0
  %90 = vmatprep.subr.mxu0 0.0
  %91 = vmatpush1.msra.mxu0 0.0
  %92 = vmatprep.subr.mxu0 0.0
  %93 = vmatpush1.msra.mxu0 0.0
  %94 = vmatprep.subr.mxu0 0.0
  %95 = vmatpush1.msra.mxu0 0.0
  %96 = vmatprep.subr.mxu0 0.0
  %97 = vmatpush1.msra.mxu0 0.0
  %98 = vmatprep.subr.mxu0 0.0
  %99 = vmatpush1.msra.mxu0 0.0
  %100 = vmatprep.subr.mxu0 0.0
  %101 = vmatpush1.msra.mxu0 0.0
  %102 = vmatprep.subr.mxu0 0.0
  %103 = vmatpush1.msra.mxu0 0.0
  %104 = vmatprep.subr.mxu0 0.0
  %105 = vmatpush1.msra.mxu0 0.0
  %106 = vmatprep.subr.mxu0 0.0
  %107 = vmatpush1.msra.mxu0 0.0
  %108 = vmatprep.subr.mxu0 0.0
  %109 = vmatpush1.msra.mxu0 0.0
  %110 = vmatprep.subr.mxu0 0.0
  %111 = vmatpush1.msra.mxu0 0.0
  %112 = vmatprep.subr.mxu0 0.0
  %113 = vmatpush1.msra.mxu0 0.0
  %114 = vmatprep.subr.mxu0 0.0
  %115 = vmatpush1.msra.mxu0 0.0
  %116 = vmatprep.subr.mxu0 0.0
  %117 = vmatpush1.msra.mxu0 0.0
  %118 = vmatprep.mubr.f32.mxu0 0.0
  %119 = vmatmul.mubr.f32.gmra.mrb[0].mxu0 %v49
  %v120 = vpop.f32.mrb[0].mxu0
  %v121 = vadd.f32 %v45, %v120
  %v122 = vpop.f32.mrb[0].mxu0
  %123 = vmatprep.mubr.f32.mxu0 0.0
  %124 = vmatmul.mubr.f32.gmra.mrb[0].mxu0 %v52
  %v125 = vpop.f32.mrb[0].mxu0
  %v126 = vadd.f32 %v45, %v125
  %v127 = vpop.f32.mrb[0].mxu0
  %128 = vdwg.mxu0
  %vm129 = vcmp.gt.f32.partialorder %v121, 0.0
  %vm130 = vcmp.gt.f32.partialorder %v126, 0.0
  %v131 = vmul.f32 %v121, 1.442695
  %v132 = vpow.pop %v131
  %v133 = vmul.f32 %v126, 1.442695
  %v134 = vpow.pop %v133
  %v135 = vsub.f32 %v132, 1.0
  %v136 = vsub.f32 %v134, 1.0
  %v137 = vsel %vm129, %v121, %v135
  %v138 = vsel %vm130, %v126, %v136
  %v139 = vld [vmem:[%s4] sm:$0xff]
  %v140 = vld [vmem:[%s4 + $0x8] sm:$0xff]
  %v141 = vld [vmem:[%s4 + $0x10] sm:$0xff]
  %v142 = vld [vmem:[%s4 + $0x18] sm:$0xff]
  %v143 = vld [vmem:[%s4 + $0x20] sm:$0xff]
  %v144 = vld [vmem:[%s4 + $0x28] sm:$0xff]
  %v145 = vld [vmem:[%s4 + $0x30] sm:$0xff]
  %v146 = vld [vmem:[%s4 + $0x38] sm:$0xff]
  %v147 = vld [vmem:[%s4 + $0x40] sm:$0xff]
  %v148 = vld [vmem:[%s4 + $0x48] sm:$0xff]
  %v149 = vld [vmem:[%s4 + $0x50] sm:$0xff]
  %v150 = vld [vmem:[%s4 + $0x58] sm:$0xff]
  %v151 = vld [vmem:[%s4 + $0x60] sm:$0xff]
  %v152 = vld [vmem:[%s4 + $0x68] sm:$0xff]
  %v153 = vld [vmem:[%s4 + $0x70] sm:$0xff]
  %v154 = vld [vmem:[%s4 + $0x78] sm:$0xff]
  %v155 = vld [vmem:[%s5] sm:$0x1]
  %v157 = vlaneseq
  %v158 = vshrl.u32 %v157, 7
  %v159 = vsub.s32 0, %v158
  %v160 = vrot.slane %v155, %v159
  %162 = vmatprep.subr.mxu0 0.0
  %163 = vmatpush1.msra.mxu0 %v139
  %164 = vmatprep.subr.mxu0 0.0
  %165 = vmatpush1.msra.mxu0 %v140
  %166 = vmatprep.subr.mxu0 0.0
  %167 = vmatpush1.msra.mxu0 %v141
  %168 = vmatprep.subr.mxu0 0.0
  %169 = vmatpush1.msra.mxu0 %v142
  %170 = vmatprep.subr.mxu0 0.0
  %171 = vmatpush1.msra.mxu0 %v143
  %172 = vmatprep.subr.mxu0 0.0
  %173 = vmatpush1.msra.mxu0 %v144
  %174 = vmatprep.subr.mxu0 0.0
  %175 = vmatpush1.msra.mxu0 %v145
  %176 = vmatprep.subr.mxu0 0.0
  %177 = vmatpush1.msra.mxu0 %v146
  %178 = vmatprep.subr.mxu0 0.0
  %179 = vmatpush1.msra.mxu0 %v147
  %180 = vmatprep.subr.mxu0 0.0
  %181 = vmatpush1.msra.mxu0 %v148
  %182 = vmatprep.subr.mxu0 0.0
  %183 = vmatpush1.msra.mxu0 %v149
  %184 = vmatprep.subr.mxu0 0.0
  %185 = vmatpush1.msra.mxu0 %v150
  %186 = vmatprep.subr.mxu0 0.0
  %187 = vmatpush1.msra.mxu0 %v151
  %188 = vmatprep.subr.mxu0 0.0
  %189 = vmatpush1.msra.mxu0 %v152
  %190 = vmatprep.subr.mxu0 0.0
  %191 = vmatpush1.msra.mxu0 %v153
  %192 = vmatprep.subr.mxu0 0.0
  %193 = vmatpush1.msra.mxu0 %v154
  %194 = vmatprep.subr.mxu0 0.0
  %195 = vmatpush1.msra.mxu0 0.0
  %196 = vmatprep.subr.mxu0 0.0
  %197 = vmatpush1.msra.mxu0 0.0
  %198 = vmatprep.subr.mxu0 0.0
  %199 = vmatpush1.msra.mxu0 0.0
  %200 = vmatprep.subr.mxu0 0.0
  %201 = vmatpush1.msra.mxu0 0.0
  %202 = vmatprep.subr.mxu0 0.0
  %203 = vmatpush1.msra.mxu0 0.0
  %204 = vmatprep.subr.mxu0 0.0
  %205 = vmatpush1.msra.mxu0 0.0
  %206 = vmatprep.subr.mxu0 0.0
  %207 = vmatpush1.msra.mxu0 0.0
  %208 = vmatprep.subr.mxu0 0.0
  %209 = vmatpush1.msra.mxu0 0.0
  %210 = vmatprep.subr.mxu0 0.0
  %211 = vmatpush1.msra.mxu0 0.0
  %212 = vmatprep.subr.mxu0 0.0
  %213 = vmatpush1.msra.mxu0 0.0
  %214 = vmatprep.subr.mxu0 0.0
  %215 = vmatpush1.msra.mxu0 0.0
  %216 = vmatprep.subr.mxu0 0.0
  %217 = vmatpush1.msra.mxu0 0.0
  %218 = vmatprep.subr.mxu0 0.0
  %219 = vmatpush1.msra.mxu0 0.0
  %220 = vmatprep.subr.mxu0 0.0
  %221 = vmatpush1.msra.mxu0 0.0
  %222 = vmatprep.subr.mxu0 0.0
  %223 = vmatpush1.msra.mxu0 0.0
  %224 = vmatprep.subr.mxu0 0.0
  %225 = vmatpush1.msra.mxu0 0.0
  %226 = vmatprep.mubr.f32.mxu0 0.0
  %227 = vmatmul.mubr.f32.gmra.mrb[0].mxu0 %v137
  %v228 = vpop.f32.mrb[0].mxu0
  %v229 = vadd.f32 %v160, %v228
  %v230 = vpop.f32.mrb[0].mxu0
  %231 = vmatprep.mubr.f32.mxu0 0.0
  %232 = vmatmul.mubr.f32.gmra.mrb[0].mxu0 %v138
  %v233 = vpop.f32.mrb[0].mxu0
  %v234 = vadd.f32 %v160, %v233
  %v235 = vpop.f32.mrb[0].mxu0
  %236 = vdwg.mxu0
  %vm237 = vcmp.gt.f32.partialorder %v229, 0.0
  %vm238 = vcmp.gt.f32.partialorder %v234, 0.0
  %v239 = vmul.f32 %v229, 1.442695
  %v240 = vpow.pop %v239
  %v241 = vmul.f32 %v234, 1.442695
  %v242 = vpow.pop %v241
  %v243 = vsub.f32 %v240, 1.0
  %v244 = vsub.f32 %v242, 1.0
  %v245 = vsel %vm237, %v229, %v243
  %v246 = vsel %vm238, %v234, %v244
  %v247 = vld [vmem:[%s6] sm:$0xff]
  %v248 = vld [vmem:[%s6 + $0x8] sm:$0xff]
  %v249 = vld [vmem:[%s6 + $0x10] sm:$0xff]
  %v250 = vld [vmem:[%s6 + $0x18] sm:$0xff]
  %vm251 = vcmask 261120
  %v253 = vsel %vm251, %v245, 0
  %v256 = vsel %vm251, %v246, 0
  %258 = vmatprep.subr.mxu0 0.0
  %259 = vmatpush1.msra.mxu0 %v247
  %260 = vmatprep.subr.mxu0 0.0
  %261 = vmatpush1.msra.mxu0 %v248
  %262 = vmatprep.subr.mxu0 0.0
  %263 = vmatpush1.msra.mxu0 %v249
  %264 = vmatprep.subr.mxu0 0.0
  %265 = vmatpush1.msra.mxu0 %v250
  %266 = vmatprep.subr.mxu0 0.0
  %267 = vmatpush1.msra.mxu0 0.0
  %268 = vmatprep.subr.mxu0 0.0
  %269 = vmatpush1.msra.mxu0 0.0
  %270 = vmatprep.subr.mxu0 0.0
  %271 = vmatpush1.msra.mxu0 0.0
  %272 = vmatprep.subr.mxu0 0.0
  %273 = vmatpush1.msra.mxu0 0.0
  %274 = vmatprep.subr.mxu0 0.0
  %275 = vmatpush1.msra.mxu0 0.0
  %276 = vmatprep.subr.mxu0 0.0
  %277 = vmatpush1.msra.mxu0 0.0
  %278 = vmatprep.subr.mxu0 0.0
  %279 = vmatpush1.msra.mxu0 0.0
  %280 = vmatprep.subr.mxu0 0.0
  %281 = vmatpush1.msra.mxu0 0.0
  %282 = vmatprep.subr.mxu0 0.0
  %283 = vmatpush1.msra.mxu0 0.0
  %284 = vmatprep.subr.mxu0 0.0
  %285 = vmatpush1.msra.mxu0 0.0
  %286 = vmatprep.subr.mxu0 0.0
  %287 = vmatpush1.msra.mxu0 0.0
  %288 = vmatprep.subr.mxu0 0.0
  %289 = vmatpush1.msra.mxu0 0.0
  %290 = vmatprep.subr.mxu0 0.0
  %291 = vmatpush1.msra.mxu0 0.0
  %292 = vmatprep.subr.mxu0 0.0
  %293 = vmatpush1.msra.mxu0 0.0
  %294 = vmatprep.subr.mxu0 0.0
  %295 = vmatpush1.msra.mxu0 0.0
  %296 = vmatprep.subr.mxu0 0.0
  %297 = vmatpush1.msra.mxu0 0.0
  %298 = vmatprep.subr.mxu0 0.0
  %299 = vmatpush1.msra.mxu0 0.0
  %300 = vmatprep.subr.mxu0 0.0
  %301 = vmatpush1.msra.mxu0 0.0
  %302 = vmatprep.subr.mxu0 0.0
  %303 = vmatpush1.msra.mxu0 0.0
  %304 = vmatprep.subr.mxu0 0.0
  %305 = vmatpush1.msra.mxu0 0.0
  %306 = vmatprep.subr.mxu0 0.0
  %307 = vmatpush1.msra.mxu0 0.0
  %308 = vmatprep.subr.mxu0 0.0
  %309 = vmatpush1.msra.mxu0 0.0
  %310 = vmatprep.subr.mxu0 0.0
  %311 = vmatpush1.msra.mxu0 0.0
  %312 = vmatprep.subr.mxu0 0.0
  %313 = vmatpush1.msra.mxu0 0.0
  %314 = vmatprep.subr.mxu0 0.0
  %315 = vmatpush1.msra.mxu0 0.0
  %316 = vmatprep.subr.mxu0 0.0
  %317 = vmatpush1.msra.mxu0 0.0
  %318 = vmatprep.subr.mxu0 0.0
  %319 = vmatpush1.msra.mxu0 0.0
  %320 = vmatprep.subr.mxu0 0.0
  %321 = vmatpush1.msra.mxu0 0.0
  %322 = vmatprep.mubr.f32.mxu0 0.0
  %323 = vmatmul.mubr.f32.gmra.mrb[0].mxu0 %v253
  %v324 = vpop.f32.mrb[0].mxu0
  %v325 = vadd.f32 0.0, %v324
  %v326 = vpop.f32.mrb[0].mxu0
  %327 = vmatprep.mubr.f32.mxu0 0.0
  %328 = vmatmul.mubr.f32.gmra.mrb[0].mxu0 %v256
  %v329 = vpop.f32.mrb[0].mxu0
  %v330 = vadd.f32 0.0, %v329
  %v331 = vpop.f32.mrb[0].mxu0
  %332 = vdwg.mxu0
  %v333 = vld [vmem:[%s1] sm:$0x3]
  %vm334 = vcmask 130048
  %v336 = vsel %vm334, %v333, 0
  %338 = vmatprep.subr.mxu0 0.0
  %339 = vmatpush1.msra.mxu0 %v325
  %340 = vmatprep.subr.mxu0 0.0
  %341 = vmatpush1.msra.mxu0 %v330
  %342 = vmatprep.subr.mxu0 0.0
  %343 = vmatpush1.msra.mxu0 0.0
  %344 = vmatprep.subr.mxu0 0.0
  %345 = vmatpush1.msra.mxu0 0.0
  %346 = vmatprep.subr.mxu0 0.0
  %347 = vmatpush1.msra.mxu0 0.0
  %348 = vmatprep.subr.mxu0 0.0
  %349 = vmatpush1.msra.mxu0 0.0
  %350 = vmatprep.subr.mxu0 0.0
  %351 = vmatpush1.msra.mxu0 0.0
  %352 = vmatprep.subr.mxu0 0.0
  %353 = vmatpush1.msra.mxu0 0.0
  %354 = vmatprep.subr.mxu0 0.0
  %355 = vmatpush1.msra.mxu0 0.0
  %356 = vmatprep.subr.mxu0 0.0
  %357 = vmatpush1.msra.mxu0 0.0
  %358 = vmatprep.subr.mxu0 0.0
  %359 = vmatpush1.msra.mxu0 0.0
  %360 = vmatprep.subr.mxu0 0.0
  %361 = vmatpush1.msra.mxu0 0.0
  %362 = vmatprep.subr.mxu0 0.0
  %363 = vmatpush1.msra.mxu0 0.0
  %364 = vmatprep.subr.mxu0 0.0
  %365 = vmatpush1.msra.mxu0 0.0
  %366 = vmatprep.subr.mxu0 0.0
  %367 = vmatpush1.msra.mxu0 0.0
  %368 = vmatprep.subr.mxu0 0.0
  %369 = vmatpush1.msra.mxu0 0.0
  %370 = vmatprep.subr.mxu0 0.0
  %371 = vmatpush1.msra.mxu0 0.0
  %372 = vmatprep.subr.mxu0 0.0
  %373 = vmatpush1.msra.mxu0 0.0
  %374 = vmatprep.subr.mxu0 0.0
  %375 = vmatpush1.msra.mxu0 0.0
  %376 = vmatprep.subr.mxu0 0.0
  %377 = vmatpush1.msra.mxu0 0.0
  %378 = vmatprep.subr.mxu0 0.0
  %379 = vmatpush1.msra.mxu0 0.0
  %380 = vmatprep.subr.mxu0 0.0
  %381 = vmatpush1.msra.mxu0 0.0
  %382 = vmatprep.subr.mxu0 0.0
  %383 = vmatpush1.msra.mxu0 0.0
  %384 = vmatprep.subr.mxu0 0.0
  %385 = vmatpush1.msra.mxu0 0.0
  %386 = vmatprep.subr.mxu0 0.0
  %387 = vmatpush1.msra.mxu0 0.0
  %388 = vmatprep.subr.mxu0 0.0
  %389 = vmatpush1.msra.mxu0 0.0
  %390 = vmatprep.subr.mxu0 0.0
  %391 = vmatpush1.msra.mxu0 0.0
  %392 = vmatprep.subr.mxu0 0.0
  %393 = vmatpush1.msra.mxu0 0.0
  %394 = vmatprep.subr.mxu0 0.0
  %395 = vmatpush1.msra.mxu0 0.0
  %396 = vmatprep.subr.mxu0 0.0
  %397 = vmatpush1.msra.mxu0 0.0
  %398 = vmatprep.subr.mxu0 0.0
  %399 = vmatpush1.msra.mxu0 0.0
  %400 = vmatprep.subr.mxu0 0.0
  %401 = vmatpush1.msra.mxu0 0.0
  %402 = vmatprep.mubr.f32.mxu0 0.0
  %403 = vmatmul.mubr.f32.gmra.mrb[0].mxu0 %v336
  %v404 = vpop.f32.mrb[0].mxu0
  %v405 = vadd.f32 0.0, %v404
  %v406 = vpop.f32.mrb[0].mxu0
  %407 = vdwg.mxu0
  %v408 = vmul.f32 %v405, 0.125
  %s409 = sld [smem:[#allocation2]]
  %v410 = vstv %s409
  %v411 = vadd.f32 %v408, %v410
  %vm412 = vcmask 1024
  %413 = vst.msk [vmem:[%s8] sm:$0x3] %vm412, %v411
  // Predicated region
  $region34: #{tpu_custom_call.1} parent=0 // pred_check
    _
  $region35: #{tpu_custom_call.1} parent=0 // pred_check_branch
    %415 = sbr.rel (0) target = $region37
  $region36: #{tpu_custom_call.1} parent=0 // pred_region
    _
  $region37: #{tpu_custom_call.1} parent=0 // pred_fallthru
    _
  // Predicated region
  $region38: #{tpu_custom_call.1} parent=0 // pred_check
    _
  $region39: #{tpu_custom_call.1} parent=0 // pred_check_branch
    %417 = sbr.rel (0) target = $region41
  $region40: #{tpu_custom_call.1} parent=0 // pred_region
    _
  $region41: #{tpu_custom_call.1} parent=0 // pred_fallthru
    _

</llo_original>
